<compile_context>
chip_gen: v6e
topology: v6e:2x2x1
jax: 0.10.0
libtpu: 0.0.40
codegen_flags: <defaults>
</compile_context>

<pallas_src>
import math

import numpy as np
import jax
import jax.numpy as jnp
from jax import lax
from jax.experimental import pallas as pl
from jax.experimental.pallas import tpu as pltpu

# ----------------------------------------------------------------------------
# Static module configuration (from ComplexCell.__init__)
# ----------------------------------------------------------------------------
K = 16                      # gabor filter size (l_filter_size=16)
STRIDE = 4
PAD = (K - 1) // 2          # 7, 'zeros' padding mode
CIN = 1                     # gabor weights are (COUT, 1, K, K) -> in_channels must be 1
N_THETA, N_SF, N_PHASE = 15, 2, 3
COUT = N_THETA * N_SF * N_PHASE     # 90 output channels
COUT_PAD = 128                      # lane-dense (multiple-of-128) channel dim
KDIM = CIN * K * K                  # 256 = contraction dim (already 128-aligned)


def _round_up(x, m):
    return (x + m - 1) // m * m


# ----------------------------------------------------------------------------
# Deterministic parameter construction (ports genGabor / gabor bank to numpy)
# ----------------------------------------------------------------------------
def gen_gabor(sz, theta, gamma, sigma, sf, phi=0.0, contrast=2.0):
    loc = (sz[0] // 2, sz[1] // 2)
    x, y = np.meshgrid(np.arange(sz[0]) - loc[0], np.arange(sz[1]) - loc[1])
    x_t = x * np.cos(theta) + y * np.sin(theta)
    y_t = -x * np.sin(theta) + y * np.cos(theta)
    env = 0.5 * contrast * np.exp(-(x_t ** 2 + (y_t * gamma) ** 2) / (2 * sigma ** 2))
    return env * np.cos(2 * math.pi * x_t * sf + phi)


def gabor_filter_bank_weights():
    # 15 orientations in [0, pi), 2 spatial freqs, 3 phases -> 90 filters.
    thetas = [i * math.pi / N_THETA for i in range(N_THETA)]
    sfs = [1.0, 2.0]
    phases = [0.0, math.pi / 2.0, math.pi]
    bank = []
    for theta in thetas:             # same nesting order as the PyTorch code
        for sf in sfs:
            for phase in phases:
                bank.append(
                    gen_gabor((K, K), theta=theta, gamma=1.0, sigma=K / 4.0,
                              sf=sf / K, phi=phase, contrast=1.0))
    w = np.asarray(bank, dtype=np.float32)[:, None, :, :]   # (COUT, 1, K, K)
    return w


# ----------------------------------------------------------------------------
# Pallas kernel: one lane-dense MXU GEMM + bias per row tile of patches
# ----------------------------------------------------------------------------
def _gemm_bias_kernel(p_ref, w_ref, b_ref, o_ref):
    # p_ref: (TM, KDIM)        bf16 patch rows (im2col'd input)
    # w_ref: (KDIM, COUT_PAD)  bf16 gabor filters, (ci,kh,kw)-flattened, zero-padded
    # b_ref: (1, COUT_PAD)     f32 conv bias, zero-padded
    # o_ref: (TM, COUT_PAD)    f32 lane-dense output tile
    # bf16 x bf16 with f32 accumulation is the MXU's exact native path; the bias
    # add happens in f32 after accumulation.
    o_ref[...] = (jnp.dot(p_ref[...], w_ref[...],
                          preferred_element_type=jnp.float32) + b_ref[...])


def _pick_row_tile(p_rows):
    """Row tile: big enough to amortize the ~0.35us/step overhead, small enough to
    keep >= ~4 grid steps (v7x has 2 TensorCores -> never collapse to one step)
    and to stay far below v5e's 16 MiB default scoped VMEM (tm=2048 bf16 is
    ~4.2 MiB double-buffered, so no vmem_limit_bytes override is needed)."""
    if p_rows >= 1024:
        return max(256, min(2048, (p_rows // (4 * 256)) * 256))
    # Tiny inputs: per-step overhead is irrelevant in absolute terms; just keep
    # the tile 8-aligned (sublane) and avoid padding waste.
    return max(8, min(_round_up(p_rows, 8), 256))


# ----------------------------------------------------------------------------
# Wrapper: bf16 NHWC im2col (padding folded in) + pallas_call + layout glue
# ----------------------------------------------------------------------------
def complex_cell_forward(x, w, b, *, channels_last=False):
    """ComplexCell forward: 16x16 gabor-bank conv, stride 4, zero pad 7, + bias.

    x: (N, 1, H, W) f32, w: (90, 1, 16, 16) f32, b: (90,) f32.
    Returns (N, 90, OH, OW) f32 (PyTorch NCHW).  Pass channels_last=True to get
    (N, OH, OW, 90) and skip the final full-output relayout pass (recommended for
    performance-sensitive callers whose consumer accepts NHWC).
    """
    n, cin, h, wd = x.shape
    assert cin == CIN, "gabor bank weights are (90, 1, 16, 16); in_channels must be 1"
    oh = (h + 2 * PAD - K) // STRIDE + 1
    ow = (wd + 2 * PAD - K) // STRIDE + 1

    # im2col with the zero padding folded in, emitted directly as NHWC so no extra
    # transpose pass over the 16x-amplified patches matrix is needed.  Operands are
    # bf16: the identity-filter gather is exact on bf16 values, halves the patches
    # HBM write + kernel read, and avoids the multi-pass HIGHEST f32 conv lowering.
    # Channel flattening order is (ci, kh, kw) -> matches w.reshape(COUT, KDIM)
    # (validated by the conv reference in __main__; trivially safe for CIN=1).
    patches = lax.conv_general_dilated_patches(
        x.astype(jnp.bfloat16),
        filter_shape=(K, K), window_strides=(STRIDE, STRIDE),
        padding=[(PAD, PAD), (PAD, PAD)],
        dimension_numbers=("NCHW", "OIHW", "NHWC"))       # -> (N, OH, OW, 256) bf16
    p_rows = n * oh * ow
    patches_2d = patches.reshape(p_rows, KDIM)

    tm = _pick_row_tile(p_rows)
    p_pad = _round_up(p_rows, tm)
    if p_pad != p_rows:
        patches_2d = jnp.pad(patches_2d, ((0, p_pad - p_rows), (0, 0)))

    # Gabor weights (bf16) zero-padded 90 -> 128 channels so every output store is
    # an unmasked, lane-dense vst; the extra MXU columns are free.  Bias stays f32.
    w_mat = jnp.pad(w.reshape(COUT, KDIM).T.astype(jnp.bfloat16),
                    ((0, 0), (0, COUT_PAD - COUT)))
    b_row = jnp.pad(b.astype(jnp.float32).reshape(1, COUT),
                    ((0, 0), (0, COUT_PAD - COUT)))

    out = pl.pallas_call(
        _gemm_bias_kernel,
        out_shape=jax.ShapeDtypeStruct((p_pad, COUT_PAD), jnp.float32),
        grid=(p_pad // tm,),
        in_specs=[
            pl.BlockSpec((tm, KDIM), lambda i: (i, 0)),
            pl.BlockSpec((KDIM, COUT_PAD), lambda i: (0, 0)),
            pl.BlockSpec((1, COUT_PAD), lambda i: (0, 0)),
        ],
        out_specs=pl.BlockSpec((tm, COUT_PAD), lambda i: (i, 0)),
        compiler_params=pltpu.CompilerParams(
            dimension_semantics=("parallel",)),
    )(patches_2d, w_mat, b_row)

    out_nhwc = out[:p_rows, :COUT].reshape(n, oh, ow, COUT)
    if channels_last:
        return out_nhwc               # channels-last, no extra transpose pass
    return jnp.transpose(out_nhwc, (0, 3, 1, 2))   # PyTorch NCHW convention


if __name__ == "__main__":
    key = jax.random.PRNGKey(0)
    kx, kb = jax.random.split(key)

    # Small deterministic inputs: batch=2, in_channels=1, 64x64 spatial
    # (p_rows = 2*16*16 = 512 -> a 2-step grid, exercising the tiled path).
    x = jax.random.normal(kx, (2, CIN, 64, 64), dtype=jnp.float32)
    w = jnp.asarray(gabor_filter_bank_weights())                    # frozen gabor weights
    bound = 1.0 / math.sqrt(CIN * K * K)                            # PyTorch conv bias range
    b = jax.random.uniform(kb, (COUT,), minval=-bound, maxval=bound,
                           dtype=jnp.float32)

    out = jax.jit(complex_cell_forward)(x, w, b)
    out = jax.block_until_ready(out)

    # Correctness check: the pipeline computes the conv on bf16-quantized
    # activations/weights with f32 accumulation, so compare against a
    # HIGHEST-precision f32 conv over the same bf16-quantized operands (this
    # validates the patch gather, GEMM, bias and layout exactly; the residual is
    # accumulation-order noise only).
    x_q = x.astype(jnp.bfloat16).astype(jnp.float32)
    w_q = w.astype(jnp.bfloat16).astype(jnp.float32)
    ref = lax.conv_general_dilated(
        x_q, w_q, window_strides=(STRIDE, STRIDE),
        padding=[(PAD, PAD), (PAD, PAD)],
        dimension_numbers=("NCHW", "OIHW", "NCHW"),
        precision=lax.Precision.HIGHEST) + b[None, :, None, None]
    np.testing.assert_allclose(np.asarray(out), np.asarray(ref), rtol=2e-3, atol=2e-3)

    print("KERNEL_OK")
</pallas_src>

<mosaic_0001>
module attributes {stable_mosaic.version = 11 : i64} {
  func.func @_gemm_bias_kernel(%arg0: i32, %arg1: memref<256x256xbf16, #tpu.memory_space<vmem>>, %arg2: memref<256x128xbf16, #tpu.memory_space<vmem>>, %arg3: memref<1x128xf32, #tpu.memory_space<vmem>>, %arg4: memref<256x128xf32, #tpu.memory_space<vmem>>) attributes {dimension_semantics = [#tpu.dimension_semantics<parallel>], iteration_bounds = array<i64: 2>, scalar_prefetch = 0 : i64, scratch_operands = 0 : i64, tpu.core_type = #tpu.core_type<tc>, window_params = [{transform_indices = @transform_0, window_bounds = array<i64: 256, 256>}, {pipeline_mode = #tpu.pipeline_mode<synchronous>, transform_indices = @transform_1, window_bounds = array<i64: 256, 128>}, {pipeline_mode = #tpu.pipeline_mode<synchronous>, transform_indices = @transform_2, window_bounds = array<i64: 1, 128>}, {transform_indices = @transform_3, window_bounds = array<i64: 256, 128>}]} {
    %c0 = arith.constant 0 : index
    %c0_0 = arith.constant 0 : index
    %0 = vector.load %arg1[%c0, %c0_0] : memref<256x256xbf16, #tpu.memory_space<vmem>>, vector<256x256xbf16>
    %c0_1 = arith.constant 0 : index
    %c0_2 = arith.constant 0 : index
    %1 = vector.load %arg2[%c0_1, %c0_2] : memref<256x128xbf16, #tpu.memory_space<vmem>>, vector<256x128xbf16>
    %cst = arith.constant dense<0.000000e+00> : vector<256x128xf32>
    %2 = tpu.matmul %0, %1, %cst {dimension_numbers = #tpu.dot_dimension_numbers<[1], [0], [0], [1], [0, 0, 1, 1], [], []>} : vector<256x256xbf16>, vector<256x128xbf16>, vector<256x128xf32> -> vector<256x128xf32>
    %c0_3 = arith.constant 0 : index
    %c0_4 = arith.constant 0 : index
    %3 = vector.load %arg3[%c0_3, %c0_4] : memref<1x128xf32, #tpu.memory_space<vmem>>, vector<1x128xf32>
    %4 = vector.broadcast %3 : vector<1x128xf32> to vector<256x128xf32>
    %5 = arith.addf %2, %4 : vector<256x128xf32>
    %c0_5 = arith.constant 0 : index
    %c0_6 = arith.constant 0 : index
    %6 = vector.load %arg4[%c0_5, %c0_6] : memref<256x128xf32, #tpu.memory_space<vmem>>, vector<256x128xf32>
    tpu.vector_store %arg4[%c0_5, %c0_6], %5 {strides = array<i32>} : memref<256x128xf32, #tpu.memory_space<vmem>>, vector<256x128xf32>,
    return
  }
  func.func @transform_0(%arg0: i32) -> (i32, i32) {
    %c0_i32 = arith.constant 0 : i32
    %c0_i32_0 = arith.constant 0 : i32
    return %arg0, %c0_i32 : i32, i32
  }
  func.func @transform_1(%arg0: i32) -> (i32, i32) {
    %c0_i32 = arith.constant 0 : i32
    %c0_i32_0 = arith.constant 0 : i32
    %c0_i32_1 = arith.constant 0 : i32
    return %c0_i32, %c0_i32_0 : i32, i32
  }
  func.func @transform_2(%arg0: i32) -> (i32, i32) {
    %c0_i32 = arith.constant 0 : i32
    %c0_i32_0 = arith.constant 0 : i32
    %c0_i32_1 = arith.constant 0 : i32
    return %c0_i32, %c0_i32_0 : i32, i32
  }
  func.func @transform_3(%arg0: i32) -> (i32, i32) {
    %c0_i32 = arith.constant 0 : i32
    %c0_i32_0 = arith.constant 0 : i32
    return %arg0, %c0_i32 : i32, i32
  }
}

</mosaic_0001>

<llo_original>
// kernel: complex_cell_forward.1
$region0: #{complex_cell_forward.1}
  #allocation0 [shape = 'u32[]', space=smem, size = 0x4, offset = 0x4, fixed_abs, tag = 'smem constant byte address 0x4 - core index']
  #allocation1 [shape = 'u32[144,128]{1,0:T(1,128)}', space=vmem, size = 0x12000, scoped, tag = 'internal scratch']
  %s0 = inlined_call_operand.vmem [shape: bf16[512,256], index: 0, kind: input, shape index: {}]
  %s1 = inlined_call_operand.vmem [shape: bf16[256,128], index: 1, kind: input, shape index: {}]
  %s2 = inlined_call_operand.vmem [shape: f32[1,128], index: 2, kind: input, shape index: {}]
  %s3 = inlined_call_operand.hbm [shape: f32[512,128], index: 3, kind: output, shape index: {}]
  %s4 = sld [smem:[#allocation0]]
  $region45: #{complex_cell_forward.1} parent=0
    _
  %s6 = ssub.s32 1, %s4
  %s7 = scalar_select 0, %s6, %s4
  $region1: #{complex_cell_forward.1} parent=0
    #allocation2 [shape = 'u8[262144]{0}', space=vmem, size = 0x40000, scoped, tag = 'output window, operand 0']
    #allocation3 [shape = 's32[2]{0}', space=sflag, size = 0x8, scoped, tag = 'scoped memory for complex_cell_forward.1']
    %8 = vsyncpa [#allocation3], 0
    %s9 = scalar_lea.sflag [#allocation3], 1
    %10 = vsyncpa %s9, 0
    loop: start=0, step=1, limit=4
    $region2: #{complex_cell_forward.1} parent=1 // loop_pre_header
      _
    $region3: #{complex_cell_forward.1} parent=1 // loop_header
      %s12 = sphi 0, %s16
      %p13 = scmp.ge.s32.totalorder %s12, 4
      %s22 = sphi 0, %s24
      %s25 = sphi 0, %s22
      %s26 = sphi 0, %s25
      %s42 = sphi 0, %s26
      %s46 = sphi 0, %s46
      %s48 = sphi 0, %s46
      %s49 = sphi 0, %s48
      %s63 = sphi 0, %s49
      %s67 = sphi 0, %s67
      %s69 = sphi 0, %s67
      %s70 = sphi 0, %s69
      %s84 = sphi 0, %s70
      %s90 = sphi 0, %s92
      %s93 = sphi 0, %s90
      %s94 = sphi 0, %s93
      %s110 = sphi 0, %s94
    $region4: #{complex_cell_forward.1} parent=1 // loop_header_branch
      %15 = sbr.rel (%p13) target = $region8
    $region5: #{complex_cell_forward.1} parent=1 // loop_body
      %s17 = ssub.s32 %s12, 1
      %s18 = ssub.s32 %s12, 2
      %s19 = sadd.s32 %s12, 1
      %s20 = ssub.s32 %s12, %s19
      %p21 = scmp.eq.s32.totalorder %s20, 0
      %s23 = sadd.s32 %s22, 1
      %s24 = scalar_select %p21, %s22, %s23
      %p27 = pneg %p21
      %p28 = scmp.eq.s32.totalorder %s12, 1
      %p29 = por %p27, %p28
      %p30 = scmp.ne.s32.totalorder %s22, %s25
      %p31 = scmp.eq.s32.totalorder %s12, 0
      %p32 = por %p30, %p31
      %p33 = scmp.ne.s32.totalorder %s22, %s25
      %p34 = scmp.eq.s32.totalorder %s17, 1
      %p35 = por %p33, %p34
      %p36 = scmp.ne.s32.totalorder %s25, %s26
      %p37 = scmp.eq.s32.totalorder %s17, 0
      %p38 = por %p36, %p37
      %p39 = scmp.ne.s32.totalorder %s25, %s26
      %p40 = scmp.eq.s32.totalorder %s18, 1
      %p41 = por %p39, %p40
      %p43 = scmp.ne.s32.totalorder %s26, %s42
      %p44 = scmp.eq.s32.totalorder %s18, 0
      %p45 = por %p43, %p44
      %s47 = sadd.s32 %s46, 1
      %p50 = scmp.eq.s32.totalorder %s12, 1
      %p51 = scmp.ne.s32.totalorder %s46, %s48
      %p52 = scmp.eq.s32.totalorder %s12, 0
      %p53 = por %p51, %p52
      %p54 = scmp.ne.s32.totalorder %s46, %s48
      %p55 = scmp.eq.s32.totalorder %s17, 1
      %p56 = por %p54, %p55
      %p57 = scmp.ne.s32.totalorder %s48, %s49
      %p58 = scmp.eq.s32.totalorder %s17, 0
      %p59 = por %p57, %p58
      %p60 = scmp.ne.s32.totalorder %s48, %s49
      %p61 = scmp.eq.s32.totalorder %s18, 1
      %p62 = por %p60, %p61
      %p64 = scmp.ne.s32.totalorder %s49, %s63
      %p65 = scmp.eq.s32.totalorder %s18, 0
      %p66 = por %p64, %p65
      %s68 = sadd.s32 %s67, 1
      %p71 = scmp.eq.s32.totalorder %s12, 1
      %p72 = scmp.ne.s32.totalorder %s67, %s69
      %p73 = scmp.eq.s32.totalorder %s12, 0
      %p74 = por %p72, %p73
      %p75 = scmp.ne.s32.totalorder %s67, %s69
      %p76 = scmp.eq.s32.totalorder %s17, 1
      %p77 = por %p75, %p76
      %p78 = scmp.ne.s32.totalorder %s69, %s70
      %p79 = scmp.eq.s32.totalorder %s17, 0
      %p80 = por %p78, %p79
      %p81 = scmp.ne.s32.totalorder %s69, %s70
      %p82 = scmp.eq.s32.totalorder %s18, 1
      %p83 = por %p81, %p82
      %p85 = scmp.ne.s32.totalorder %s70, %s84
      %p86 = scmp.eq.s32.totalorder %s18, 0
      %p87 = por %p85, %p86
      %s88 = ssub.s32 %s12, %s19
      %p89 = scmp.eq.s32.totalorder %s88, 0
      %s91 = sadd.s32 %s90, 1
      %s92 = scalar_select %p89, %s90, %s91
      %p95 = pneg %p89
      %p96 = scmp.eq.s32.totalorder %s12, 1
      %p97 = por %p95, %p96
      %p98 = scmp.ne.s32.totalorder %s90, %s93
      %p99 = scmp.eq.s32.totalorder %s12, 0
      %p100 = por %p98, %p99
      %p101 = scmp.ne.s32.totalorder %s90, %s93
      %p102 = scmp.eq.s32.totalorder %s17, 1
      %p103 = por %p101, %p102
      %p104 = scmp.ne.s32.totalorder %s93, %s94
      %p105 = scmp.eq.s32.totalorder %s17, 0
      %p106 = por %p104, %p105
      %p107 = scmp.ne.s32.totalorder %s93, %s94
      %p108 = scmp.eq.s32.totalorder %s18, 1
      %p109 = por %p107, %p108
      %p111 = scmp.ne.s32.totalorder %s94, %s110
      %p112 = scmp.eq.s32.totalorder %s18, 0
      %p113 = por %p111, %p112
      %p114 = scmp.le.s32.totalorder 1, %s12
      %p115 = scmp.lt.s32.totalorder %s12, 3
      %p116 = pnand %p114, %p115
      %p117 = pneg %p116
      // Predicated region
      $region9: #{complex_cell_forward.1} parent=5 // pred_check
        _
      $region10: #{complex_cell_forward.1} parent=5 // pred_check_branch
        %119 = sbr.rel (%p116) target = $region12
      $region11: #{complex_cell_forward.1} parent=5 // pred_region
        %s120 = ssub.s32 %s12, 1
        // Predicated region
        $region13: #{complex_cell_forward.1} parent=11 // pred_check
          %p121 = pneg %p59
        $region14: #{complex_cell_forward.1} parent=11 // pred_check_branch
          %123 = sbr.rel (%p121) target = $region16
        $region15: #{complex_cell_forward.1} parent=11 // pred_region
          _
        $region16: #{complex_cell_forward.1} parent=11 // pred_fallthru
          _
        // Predicated region
        $region17: #{complex_cell_forward.1} parent=11 // pred_check
          %p124 = pneg %p80
        $region18: #{complex_cell_forward.1} parent=11 // pred_check_branch
          %126 = sbr.rel (%p124) target = $region20
        $region19: #{complex_cell_forward.1} parent=11 // pred_region
          _
        $region20: #{complex_cell_forward.1} parent=11 // pred_fallthru
          _
      $region12: #{complex_cell_forward.1} parent=5 // pred_fallthru
        _
      %p127 = scmp.lt.s32.totalorder %s12, 2
      // Predicated region
      $region21: #{complex_cell_forward.1} parent=5 // pred_check
        %p128 = pneg %p127
      $region22: #{complex_cell_forward.1} parent=5 // pred_check_branch
        %130 = sbr.rel (%p128) target = $region24
      $region23: #{complex_cell_forward.1} parent=5 // pred_region
        // Predicated region
        $region25: #{complex_cell_forward.1} parent=23 // pred_check
          %p131 = pneg %p32
        $region26: #{complex_cell_forward.1} parent=23 // pred_check_branch
          %133 = sbr.rel (%p131) target = $region28
        $region27: #{complex_cell_forward.1} parent=23 // pred_region
          %s134 = smul.u32 32, %s12
          %p135 = scmp.lt.s32.totalorder %s134, 63
          %s136 = scalar_select %p135, %s134, 63
          %s137 = smul.addr %s136, 2
          %s138 = smul.addr %s137, 4
          %s139 = scalar_lea.vmem %s0, %s138
          %s140 = smul.u32 32, %s12
        $region28: #{complex_cell_forward.1} parent=23 // pred_fallthru
          _
      $region24: #{complex_cell_forward.1} parent=5 // pred_fallthru
        _
      %p141 = scmp.le.s32.totalorder 1, %s12
      %p142 = scmp.lt.s32.totalorder %s12, 3
      %p143 = pnand %p141, %p142
      %p144 = pneg %p143
      // Predicated region
      $region29: #{complex_cell_forward.1} parent=5 // pred_check
        _
      $region30: #{complex_cell_forward.1} parent=5 // pred_check_branch
        %146 = sbr.rel (%p143) target = $region32
      $region31: #{complex_cell_forward.1} parent=5 // pred_region
        %s147 = ssub.s32 %s12, 1
        %s148 = smul.u32 32, %s17
        %p149 = scmp.lt.s32.totalorder %s148, 63
        %s150 = scalar_select %p149, %s148, 63
        %s151 = smul.addr %s150, 2
        %s152 = smul.addr %s151, 4
        %s153 = scalar_lea.vmem %s0, %s152
        %p154 = pneg %p38
        %p155 = pneg %p35
        %p156 = pneg %p59
        %p157 = pneg %p56
        %p158 = pneg %p80
        %p159 = pneg %p77
        %p160 = pneg %p106
        %p161 = pneg %p103
        %s162 = sand.u32 %s93, 1
        %s163 = scalar_lea.sflag [#allocation3], %s162
        %s164 = sand.u32 %s93, 1
        %s165 = smul.addr %s164, 256
        %s166 = scalar_lea.vmem [#allocation2], %s165
        %s167 = smul.u32 32, %s17
        %p168 = scmp.lt.s32.totalorder %s167, 63
        %s169 = scalar_select %p168, %s167, 63
        %s170 = smul.addr %s169, 2
        %s171 = smul.addr %s170, 4
        %s172 = scalar_lea.vmem %s0, %s171
        %s173 = smul.u32 32, %s17
        %s174 = smul.u32 32, %s17
        %v176 = vld [vmem:[%s172] sm:$0xff]
        %v177 = vld [vmem:[%s172 + $0x8] sm:$0xff]
        %v178 = vld [vmem:[%s172 + $0x10] sm:$0xff]
        %v179 = vld [vmem:[%s172 + $0x18] sm:$0xff]
        %v180 = vld [vmem:[%s172 + $0x20] sm:$0xff]
        %v181 = vld [vmem:[%s172 + $0x28] sm:$0xff]
        %v182 = vld [vmem:[%s172 + $0x30] sm:$0xff]
        %v183 = vld [vmem:[%s172 + $0x38] sm:$0xff]
        %v184 = vld [vmem:[%s172 + $0x40] sm:$0xff]
        %v185 = vld [vmem:[%s172 + $0x48] sm:$0xff]
        %v186 = vld [vmem:[%s172 + $0x50] sm:$0xff]
        %v187 = vld [vmem:[%s172 + $0x58] sm:$0xff]
        %v188 = vld [vmem:[%s172 + $0x60] sm:$0xff]
        %v189 = vld [vmem:[%s172 + $0x68] sm:$0xff]
        %v190 = vld [vmem:[%s172 + $0x70] sm:$0xff]
        %v191 = vld [vmem:[%s172 + $0x78] sm:$0xff]
        %v192 = vld [vmem:[%s172 + $0x80] sm:$0xff]
        %v193 = vld [vmem:[%s172 + $0x88] sm:$0xff]
        %v194 = vld [vmem:[%s172 + $0x90] sm:$0xff]
        %v195 = vld [vmem:[%s172 + $0x98] sm:$0xff]
        %v196 = vld [vmem:[%s172 + $0xa0] sm:$0xff]
        %v197 = vld [vmem:[%s172 + $0xa8] sm:$0xff]
        %v198 = vld [vmem:[%s172 + $0xb0] sm:$0xff]
        %v199 = vld [vmem:[%s172 + $0xb8] sm:$0xff]
        %v200 = vld [vmem:[%s172 + $0xc0] sm:$0xff]
        %v201 = vld [vmem:[%s172 + $0xc8] sm:$0xff]
        %v202 = vld [vmem:[%s172 + $0xd0] sm:$0xff]
        %v203 = vld [vmem:[%s172 + $0xd8] sm:$0xff]
        %v204 = vld [vmem:[%s172 + $0xe0] sm:$0xff]
        %v205 = vld [vmem:[%s172 + $0xe8] sm:$0xff]
        %v206 = vld [vmem:[%s172 + $0xf0] sm:$0xff]
        %v207 = vld [vmem:[%s172 + $0xf8] sm:$0xff]
        %v208 = vld [vmem:[%s1] sm:$0xf]
        %v209 = vld [vmem:[%s1 + $0x4] sm:$0xf]
        %v210 = vld [vmem:[%s1 + $0x8] sm:$0xf]
        %v211 = vld [vmem:[%s1 + $0xc] sm:$0xf]
        %v212 = vld [vmem:[%s1 + $0x10] sm:$0xf]
        %v213 = vld [vmem:[%s1 + $0x14] sm:$0xf]
        %v214 = vld [vmem:[%s1 + $0x18] sm:$0xf]
        %v215 = vld [vmem:[%s1 + $0x1c] sm:$0xf]
        %v216 = vld [vmem:[%s1 + $0x20] sm:$0xf]
        %v217 = vld [vmem:[%s1 + $0x24] sm:$0xf]
        %v218 = vld [vmem:[%s1 + $0x28] sm:$0xf]
        %v219 = vld [vmem:[%s1 + $0x2c] sm:$0xf]
        %v220 = vld [vmem:[%s1 + $0x30] sm:$0xf]
        %v221 = vld [vmem:[%s1 + $0x34] sm:$0xf]
        %v222 = vld [vmem:[%s1 + $0x38] sm:$0xf]
        %v223 = vld [vmem:[%s1 + $0x3c] sm:$0xf]
        %v224 = vld [vmem:[%s1 + $0x40] sm:$0xf]
        %v225 = vld [vmem:[%s1 + $0x44] sm:$0xf]
        %v226 = vld [vmem:[%s1 + $0x48] sm:$0xf]
        %v227 = vld [vmem:[%s1 + $0x4c] sm:$0xf]
        %v228 = vld [vmem:[%s1 + $0x50] sm:$0xf]
        %v229 = vld [vmem:[%s1 + $0x54] sm:$0xf]
        %v230 = vld [vmem:[%s1 + $0x58] sm:$0xf]
        %v231 = vld [vmem:[%s1 + $0x5c] sm:$0xf]
        %v232 = vld [vmem:[%s1 + $0x60] sm:$0xf]
        %v233 = vld [vmem:[%s1 + $0x64] sm:$0xf]
        %v234 = vld [vmem:[%s1 + $0x68] sm:$0xf]
        %v235 = vld [vmem:[%s1 + $0x6c] sm:$0xf]
        %v236 = vld [vmem:[%s1 + $0x70] sm:$0xf]
        %v237 = vld [vmem:[%s1 + $0x74] sm:$0xf]
        %v238 = vld [vmem:[%s1 + $0x78] sm:$0xf]
        %v239 = vld [vmem:[%s1 + $0x7c] sm:$0xf]
        %v240 = vld [vmem:[%s2] sm:$0x1]
        %v242 = vlaneseq
        %v243 = vshrl.u32 %v242, 7
        %v244 = vsub.s32 0, %v243
        %v245 = vrot.slane %v240, %v244
        %v279 = vunpack.c.l.b16 %v176
        %v280 = vunpack.c.h.b16 %v176
        %v281 = vunpack.c.l.b16 %v177
        %v282 = vunpack.c.h.b16 %v177
        %v283 = vunpack.c.l.b16 %v178
        %v284 = vunpack.c.h.b16 %v178
        %v285 = vunpack.c.l.b16 %v179
        %v286 = vunpack.c.h.b16 %v179
        %v287 = vunpack.c.l.b16 %v180
        %v288 = vunpack.c.h.b16 %v180
        %v289 = vunpack.c.l.b16 %v181
        %v290 = vunpack.c.h.b16 %v181
        %v291 = vunpack.c.l.b16 %v182
        %v292 = vunpack.c.h.b16 %v182
        %v293 = vunpack.c.l.b16 %v183
        %v294 = vunpack.c.h.b16 %v183
        %v295 = vunpack.c.l.b16 %v184
        %v296 = vunpack.c.h.b16 %v184
        %v297 = vunpack.c.l.b16 %v185
        %v298 = vunpack.c.h.b16 %v185
        %v299 = vunpack.c.l.b16 %v186
        %v300 = vunpack.c.h.b16 %v186
        %v301 = vunpack.c.l.b16 %v187
        %v302 = vunpack.c.h.b16 %v187
        %v303 = vunpack.c.l.b16 %v188
        %v304 = vunpack.c.h.b16 %v188
        %v305 = vunpack.c.l.b16 %v189
        %v306 = vunpack.c.h.b16 %v189
        %v307 = vunpack.c.l.b16 %v190
        %v308 = vunpack.c.h.b16 %v190
        %v309 = vunpack.c.l.b16 %v191
        %v310 = vunpack.c.h.b16 %v191
        %v311 = vunpack.c.l.b16 %v192
        %v312 = vunpack.c.h.b16 %v192
        %v313 = vunpack.c.l.b16 %v193
        %v314 = vunpack.c.h.b16 %v193
        %v315 = vunpack.c.l.b16 %v194
        %v316 = vunpack.c.h.b16 %v194
        %v317 = vunpack.c.l.b16 %v195
        %v318 = vunpack.c.h.b16 %v195
        %v319 = vunpack.c.l.b16 %v196
        %v320 = vunpack.c.h.b16 %v196
        %v321 = vunpack.c.l.b16 %v197
        %v322 = vunpack.c.h.b16 %v197
        %v323 = vunpack.c.l.b16 %v198
        %v324 = vunpack.c.h.b16 %v198
        %v325 = vunpack.c.l.b16 %v199
        %v326 = vunpack.c.h.b16 %v199
        %v327 = vunpack.c.l.b16 %v200
        %v328 = vunpack.c.h.b16 %v200
        %v329 = vunpack.c.l.b16 %v201
        %v330 = vunpack.c.h.b16 %v201
        %v331 = vunpack.c.l.b16 %v202
        %v332 = vunpack.c.h.b16 %v202
        %v333 = vunpack.c.l.b16 %v203
        %v334 = vunpack.c.h.b16 %v203
        %v335 = vunpack.c.l.b16 %v204
        %v336 = vunpack.c.h.b16 %v204
        %v337 = vunpack.c.l.b16 %v205
        %v338 = vunpack.c.h.b16 %v205
        %v339 = vunpack.c.l.b16 %v206
        %v340 = vunpack.c.h.b16 %v206
        %v341 = vunpack.c.l.b16 %v207
        %v342 = vunpack.c.h.b16 %v207
        %v343 = vpack.c.b16 %v281, %v279
        %v344 = vpack.c.b16 %v282, %v280
        %v345 = vpack.c.b16 %v285, %v283
        %v346 = vpack.c.b16 %v286, %v284
        %v347 = vpack.c.b16 %v289, %v287
        %v348 = vpack.c.b16 %v290, %v288
        %v349 = vpack.c.b16 %v293, %v291
        %v350 = vpack.c.b16 %v294, %v292
        %v351 = vpack.c.b16 %v297, %v295
        %v352 = vpack.c.b16 %v298, %v296
        %v353 = vpack.c.b16 %v301, %v299
        %v354 = vpack.c.b16 %v302, %v300
        %v355 = vpack.c.b16 %v305, %v303
        %v356 = vpack.c.b16 %v306, %v304
        %v357 = vpack.c.b16 %v309, %v307
        %v358 = vpack.c.b16 %v310, %v308
        %v359 = vpack.c.b16 %v313, %v311
        %v360 = vpack.c.b16 %v314, %v312
        %v361 = vpack.c.b16 %v317, %v315
        %v362 = vpack.c.b16 %v318, %v316
        %v363 = vpack.c.b16 %v321, %v319
        %v364 = vpack.c.b16 %v322, %v320
        %v365 = vpack.c.b16 %v325, %v323
        %v366 = vpack.c.b16 %v326, %v324
        %v367 = vpack.c.b16 %v329, %v327
        %v368 = vpack.c.b16 %v330, %v328
        %v369 = vpack.c.b16 %v333, %v331
        %v370 = vpack.c.b16 %v334, %v332
        %v371 = vpack.c.b16 %v337, %v335
        %v372 = vpack.c.b16 %v338, %v336
        %v373 = vpack.c.b16 %v341, %v339
        %v374 = vpack.c.b16 %v342, %v340
        %v439 = vunpack.c.l.b16 %v208
        %v440 = vunpack.c.l.b16 %v209
        %v441 = vunpack.c.l.b16 %v210
        %v442 = vunpack.c.l.b16 %v211
        %v443 = vunpack.c.l.b16 %v212
        %v444 = vunpack.c.l.b16 %v213
        %v445 = vunpack.c.l.b16 %v214
        %v446 = vunpack.c.l.b16 %v215
        %v447 = vunpack.c.l.b16 %v216
        %v448 = vunpack.c.l.b16 %v217
        %v449 = vunpack.c.l.b16 %v218
        %v450 = vunpack.c.l.b16 %v219
        %v451 = vunpack.c.l.b16 %v220
        %v452 = vunpack.c.l.b16 %v221
        %v453 = vunpack.c.l.b16 %v222
        %v454 = vunpack.c.l.b16 %v223
        %v455 = vunpack.c.l.b16 %v224
        %v456 = vunpack.c.l.b16 %v225
        %v457 = vunpack.c.l.b16 %v226
        %v458 = vunpack.c.l.b16 %v227
        %v459 = vunpack.c.l.b16 %v228
        %v460 = vunpack.c.l.b16 %v229
        %v461 = vunpack.c.l.b16 %v230
        %v462 = vunpack.c.l.b16 %v231
        %v463 = vunpack.c.l.b16 %v232
        %v464 = vunpack.c.l.b16 %v233
        %v465 = vunpack.c.l.b16 %v234
        %v466 = vunpack.c.l.b16 %v235
        %v467 = vunpack.c.l.b16 %v236
        %v468 = vunpack.c.l.b16 %v237
        %v469 = vunpack.c.l.b16 %v238
        %v470 = vunpack.c.l.b16 %v239
        %v471 = vpack.c.b16 %v440, %v439
        %v472 = vpack.c.b16 %v442, %v441
        %v473 = vpack.c.b16 %v444, %v443
        %v474 = vpack.c.b16 %v446, %v445
        %v475 = vpack.c.b16 %v448, %v447
        %v476 = vpack.c.b16 %v450, %v449
        %v477 = vpack.c.b16 %v452, %v451
        %v478 = vpack.c.b16 %v454, %v453
        %v479 = vpack.c.b16 %v456, %v455
        %v480 = vpack.c.b16 %v458, %v457
        %v481 = vpack.c.b16 %v460, %v459
        %v482 = vpack.c.b16 %v462, %v461
        %v483 = vpack.c.b16 %v464, %v463
        %v484 = vpack.c.b16 %v466, %v465
        %v485 = vpack.c.b16 %v468, %v467
        %v486 = vpack.c.b16 %v470, %v469
        %503 = vmatprep.subr.bf16.mxu0 0
        %504 = vmatpush1.bf16.msra.mxu0 %v478
        %505 = vmatprep.subr.bf16.mxu0 0
        %506 = vmatpush1.bf16.msra.mxu0 %v477
        %507 = vmatprep.subr.bf16.mxu0 0
        %508 = vmatpush1.bf16.msra.mxu0 %v476
        %509 = vmatprep.subr.bf16.mxu0 0
        %510 = vmatpush1.bf16.msra.mxu0 %v475
        %511 = vmatprep.subr.bf16.mxu0 0
        %512 = vmatpush1.bf16.msra.mxu0 %v474
        %513 = vmatprep.subr.bf16.mxu0 0
        %514 = vmatpush1.bf16.msra.mxu0 %v473
        %515 = vmatprep.subr.bf16.mxu0 0
        %516 = vmatpush1.bf16.msra.mxu0 %v472
        %517 = vmatprep.subr.bf16.mxu0 0
        %518 = vmatpush1.bf16.msra.mxu0 %v471
        %519 = vmatprep.subr.bf16.mxu0 0
        %520 = vmatpush2.bf16.msra.mxu0 %v486
        %521 = vmatprep.subr.bf16.mxu0 0
        %522 = vmatpush2.bf16.msra.mxu0 %v485
        %523 = vmatprep.subr.bf16.mxu0 0
        %524 = vmatpush2.bf16.msra.mxu0 %v484
        %525 = vmatprep.subr.bf16.mxu0 0
        %526 = vmatpush2.bf16.msra.mxu0 %v483
        %527 = vmatprep.subr.bf16.mxu0 0
        %528 = vmatpush2.bf16.msra.mxu0 %v482
        %529 = vmatprep.subr.bf16.mxu0 0
        %530 = vmatpush2.bf16.msra.mxu0 %v481
        %531 = vmatprep.subr.bf16.mxu0 0
        %532 = vmatpush2.bf16.msra.mxu0 %v480
        %533 = vmatprep.subr.bf16.mxu0 0
        %534 = vmatpush2.bf16.msra.mxu0 %v479
        %535 = vmatprep.mubr.bf16.mxu0 %v344
        %536 = vmatmul.mubr.bf16.gmra.mxu0 %v343
        %v537 = vpop.f32.mrf.mxu0
        %v538 = vadd.f32 %v245, %v537
        %v539 = vpop.f32.mrf.mxu0
        %v540 = vpop.f32.mrf.mxu0
        %v541 = vadd.f32 %v245, %v540
        %v542 = vpop.f32.mrf.mxu0
        %543 = vmatprep.mubr.bf16.mxu0 %v346
        %544 = vmatmul.mubr.bf16.gmra.mxu0 %v345
        %v545 = vpop.f32.mrf.mxu0
        %v546 = vadd.f32 %v245, %v545
        %v547 = vpop.f32.mrf.mxu0
        %v548 = vpop.f32.mrf.mxu0
        %v549 = vadd.f32 %v245, %v548
        %v550 = vpop.f32.mrf.mxu0
        %551 = vmatprep.mubr.bf16.mxu0 %v348
        %552 = vmatmul.mubr.bf16.gmra.mxu0 %v347
        %v553 = vpop.f32.mrf.mxu0
        %v554 = vadd.f32 %v245, %v553
        %v555 = vpop.f32.mrf.mxu0
        %v556 = vpop.f32.mrf.mxu0
        %v557 = vadd.f32 %v245, %v556
        %v558 = vpop.f32.mrf.mxu0
        %559 = vmatprep.mubr.bf16.mxu0 %v350
        %560 = vmatmul.mubr.bf16.gmra.mxu0 %v349
        %v561 = vpop.f32.mrf.mxu0
        %v562 = vadd.f32 %v245, %v561
        %v563 = vpop.f32.mrf.mxu0
        %v564 = vpop.f32.mrf.mxu0
        %v565 = vadd.f32 %v245, %v564
        %v566 = vpop.f32.mrf.mxu0
        %567 = vmatprep.mubr.bf16.mxu0 %v352
        %568 = vmatmul.mubr.bf16.gmra.mxu0 %v351
        %v569 = vpop.f32.mrf.mxu0
        %v570 = vadd.f32 %v245, %v569
        %v571 = vpop.f32.mrf.mxu0
        %v572 = vpop.f32.mrf.mxu0
        %v573 = vadd.f32 %v245, %v572
        %v574 = vpop.f32.mrf.mxu0
        %575 = vmatprep.mubr.bf16.mxu0 %v354
        %576 = vmatmul.mubr.bf16.gmra.mxu0 %v353
        %v577 = vpop.f32.mrf.mxu0
        %v578 = vadd.f32 %v245, %v577
        %v579 = vpop.f32.mrf.mxu0
        %v580 = vpop.f32.mrf.mxu0
        %v581 = vadd.f32 %v245, %v580
        %v582 = vpop.f32.mrf.mxu0
        %583 = vmatprep.mubr.bf16.mxu0 %v356
        %584 = vmatmul.mubr.bf16.gmra.mxu0 %v355
        %v585 = vpop.f32.mrf.mxu0
        %v586 = vadd.f32 %v245, %v585
        %v587 = vpop.f32.mrf.mxu0
        %v588 = vpop.f32.mrf.mxu0
        %v589 = vadd.f32 %v245, %v588
        %v590 = vpop.f32.mrf.mxu0
        %591 = vmatprep.mubr.bf16.mxu0 %v358
        %592 = vmatmul.mubr.bf16.gmra.mxu0 %v357
        %v593 = vpop.f32.mrf.mxu0
        %v594 = vadd.f32 %v245, %v593
        %v595 = vpop.f32.mrf.mxu0
        %v596 = vpop.f32.mrf.mxu0
        %v597 = vadd.f32 %v245, %v596
        %v598 = vpop.f32.mrf.mxu0
        %599 = vmatprep.mubr.bf16.mxu0 %v360
        %600 = vmatmul.mubr.bf16.gmra.mxu0 %v359
        %v601 = vpop.f32.mrf.mxu0
        %v602 = vadd.f32 %v245, %v601
        %v603 = vpop.f32.mrf.mxu0
        %v604 = vpop.f32.mrf.mxu0
        %v605 = vadd.f32 %v245, %v604
        %v606 = vpop.f32.mrf.mxu0
        %607 = vmatprep.mubr.bf16.mxu0 %v362
        %608 = vmatmul.mubr.bf16.gmra.mxu0 %v361
        %v609 = vpop.f32.mrf.mxu0
        %v610 = vadd.f32 %v245, %v609
        %v611 = vpop.f32.mrf.mxu0
        %v612 = vpop.f32.mrf.mxu0
        %v613 = vadd.f32 %v245, %v612
        %v614 = vpop.f32.mrf.mxu0
        %615 = vmatprep.mubr.bf16.mxu0 %v364
        %616 = vmatmul.mubr.bf16.gmra.mxu0 %v363
        %v617 = vpop.f32.mrf.mxu0
        %v618 = vadd.f32 %v245, %v617
        %v619 = vpop.f32.mrf.mxu0
        %v620 = vpop.f32.mrf.mxu0
        %v621 = vadd.f32 %v245, %v620
        %v622 = vpop.f32.mrf.mxu0
        %623 = vmatprep.mubr.bf16.mxu0 %v366
        %624 = vmatmul.mubr.bf16.gmra.mxu0 %v365
        %v625 = vpop.f32.mrf.mxu0
        %v626 = vadd.f32 %v245, %v625
        %v627 = vpop.f32.mrf.mxu0
        %v628 = vpop.f32.mrf.mxu0
        %v629 = vadd.f32 %v245, %v628
        %v630 = vpop.f32.mrf.mxu0
        %631 = vmatprep.mubr.bf16.mxu0 %v368
        %632 = vmatmul.mubr.bf16.gmra.mxu0 %v367
        %v633 = vpop.f32.mrf.mxu0
        %v634 = vadd.f32 %v245, %v633
        %v635 = vpop.f32.mrf.mxu0
        %v636 = vpop.f32.mrf.mxu0
        %v637 = vadd.f32 %v245, %v636
        %v638 = vpop.f32.mrf.mxu0
        %639 = vmatprep.mubr.bf16.mxu0 %v370
        %640 = vmatmul.mubr.bf16.gmra.mxu0 %v369
        %v641 = vpop.f32.mrf.mxu0
        %v642 = vadd.f32 %v245, %v641
        %v643 = vpop.f32.mrf.mxu0
        %v644 = vpop.f32.mrf.mxu0
        %v645 = vadd.f32 %v245, %v644
        %v646 = vpop.f32.mrf.mxu0
        %647 = vmatprep.mubr.bf16.mxu0 %v372
        %648 = vmatmul.mubr.bf16.gmra.mxu0 %v371
        %v649 = vpop.f32.mrf.mxu0
        %v650 = vadd.f32 %v245, %v649
        %v651 = vpop.f32.mrf.mxu0
        %v652 = vpop.f32.mrf.mxu0
        %v653 = vadd.f32 %v245, %v652
        %v654 = vpop.f32.mrf.mxu0
        %655 = vmatprep.mubr.bf16.mxu0 %v374
        %656 = vmatmul.mubr.bf16.gmra.mxu0 %v373
        %v657 = vpop.f32.mrf.mxu0
        %v658 = vadd.f32 %v245, %v657
        %v659 = vpop.f32.mrf.mxu0
        %v660 = vpop.f32.mrf.mxu0
        %v661 = vadd.f32 %v245, %v660
        %v662 = vpop.f32.mrf.mxu0
        %663 = vdwg.mxu0
        %664 = vst [vmem:[%s166] sm:$0xff] %v538
        %665 = vst [vmem:[%s166 + $0x8] sm:$0xff] %v541
        %666 = vst [vmem:[%s166 + $0x10] sm:$0xff] %v546
        %667 = vst [vmem:[%s166 + $0x18] sm:$0xff] %v549
        %668 = vst [vmem:[%s166 + $0x20] sm:$0xff] %v554
        %669 = vst [vmem:[%s166 + $0x28] sm:$0xff] %v557
        %670 = vst [vmem:[%s166 + $0x30] sm:$0xff] %v562
        %671 = vst [vmem:[%s166 + $0x38] sm:$0xff] %v565
        %672 = vst [vmem:[%s166 + $0x40] sm:$0xff] %v570
        %673 = vst [vmem:[%s166 + $0x48] sm:$0xff] %v573
        %674 = vst [vmem:[%s166 + $0x50] sm:$0xff] %v578
        %675 = vst [vmem:[%s166 + $0x58] sm:$0xff] %v581
        %676 = vst [vmem:[%s166 + $0x60] sm:$0xff] %v586
        %677 = vst [vmem:[%s166 + $0x68] sm:$0xff] %v589
        %678 = vst [vmem:[%s166 + $0x70] sm:$0xff] %v594
        %679 = vst [vmem:[%s166 + $0x78] sm:$0xff] %v597
        %680 = vst [vmem:[%s166 + $0x80] sm:$0xff] %v602
        %681 = vst [vmem:[%s166 + $0x88] sm:$0xff] %v605
        %682 = vst [vmem:[%s166 + $0x90] sm:$0xff] %v610
        %683 = vst [vmem:[%s166 + $0x98] sm:$0xff] %v613
        %684 = vst [vmem:[%s166 + $0xa0] sm:$0xff] %v618
        %685 = vst [vmem:[%s166 + $0xa8] sm:$0xff] %v621
        %686 = vst [vmem:[%s166 + $0xb0] sm:$0xff] %v626
        %687 = vst [vmem:[%s166 + $0xb8] sm:$0xff] %v629
        %688 = vst [vmem:[%s166 + $0xc0] sm:$0xff] %v634
        %689 = vst [vmem:[%s166 + $0xc8] sm:$0xff] %v637
        %690 = vst [vmem:[%s166 + $0xd0] sm:$0xff] %v642
        %691 = vst [vmem:[%s166 + $0xd8] sm:$0xff] %v645
        %692 = vst [vmem:[%s166 + $0xe0] sm:$0xff] %v650
        %693 = vst [vmem:[%s166 + $0xe8] sm:$0xff] %v653
        %694 = vst [vmem:[%s166 + $0xf0] sm:$0xff] %v658
        %695 = vst [vmem:[%s166 + $0xf8] sm:$0xff] %v661
        %s696 = sand.u32 %s93, 1
        %s697 = scalar_lea.sflag [#allocation3], %s696
        %s698 = sand.u32 %s93, 1
        %s699 = smul.addr %s698, 256
        %s700 = scalar_lea.vmem [#allocation2], %s699
        // Predicated region
        $region33: #{complex_cell_forward.1} parent=31 // pred_check
          %p701 = pneg %p103
        $region34: #{complex_cell_forward.1} parent=31 // pred_check_branch
          %703 = sbr.rel (%p701) target = $region36
        $region35: #{complex_cell_forward.1} parent=31 // pred_region
          %s704 = smul.u32 32, %s17
          %s706 = ssub.s32 4096, 4096
          %707 = vsyncadd %s697, %s706
          %s708 = smul.addr %s704, 128
          %s709 = scalar_lea.hbm %s3, %s708
          %s710 = sshll.u32 %s700, 4
          %s711 = int_to_ptr.vmem [resolvable:$true] %s710
          %716 = dma.vmem_to_hbm [thread:$0]  %s711, 4096, %s709, %s697, 128, 128, 8
        $region36: #{complex_cell_forward.1} parent=31 // pred_fallthru
          _
      $region32: #{complex_cell_forward.1} parent=5 // pred_fallthru
        _
      %p717 = scmp.le.s32.totalorder 2, %s12
      // Predicated region
      $region37: #{complex_cell_forward.1} parent=5 // pred_check
        %p718 = pneg %p717
      $region38: #{complex_cell_forward.1} parent=5 // pred_check_branch
        %720 = sbr.rel (%p718) target = $region40
      $region39: #{complex_cell_forward.1} parent=5 // pred_region
        %s721 = ssub.s32 %s12, 2
        // Predicated region
        $region41: #{complex_cell_forward.1} parent=39 // pred_check
          %p722 = pneg %p109
        $region42: #{complex_cell_forward.1} parent=39 // pred_check_branch
          %724 = sbr.rel (%p722) target = $region44
        $region43: #{complex_cell_forward.1} parent=39 // pred_region
          %s725 = sand.u32 %s94, 1
          %s726 = scalar_lea.sflag [#allocation3], %s725
          %s727 = sand.u32 %s94, 1
          %s728 = smul.addr %s727, 256
          %s729 = scalar_lea.vmem [#allocation2], %s728
          %730 = dma.done %s726, 4096
        $region44: #{complex_cell_forward.1} parent=39 // pred_fallthru
          _
      $region40: #{complex_cell_forward.1} parent=5 // pred_fallthru
        _
    $region6: #{complex_cell_forward.1} parent=1 // loop_footer
      %s16 = sadd.s32 1, %s12
    $region7: #{complex_cell_forward.1} parent=1 // loop_footer_branch
      %11 = sbr.rel target = $region3
    $region8: #{complex_cell_forward.1} parent=1 // loop_exit
      _
    %731 = vsyncpa [#allocation3], 1
    %s732 = scalar_lea.sflag [#allocation3], 1
    %733 = vsyncpa %s732, 1

</llo_original>
